<compile_context>
chip_gen: v7x
topology: tpu7x:2x2x1
jax: 0.10.0
libtpu: 0.0.40
codegen_flags: <defaults>
</compile_context>

<pallas_src>
import functools

import jax
import jax.numpy as jnp
from jax import lax
from jax.experimental import pallas as pl
from jax.experimental.pallas import tpu as pltpu


_LANE = 128


def _round_up(x, m):
    return (x + m - 1) // m * m


def _vmem_limit_bytes():
    """Generation-aware scoped-VMEM limit (v5e/v6e ~96 MiB, v7x ~48 MiB)."""
    try:
        cap = int(pltpu.get_tpu_info().vmem_capacity_bytes)
    except Exception:
        cap = 64 << 20  # conservative (v7x-class) fallback
    return min(96 << 20, (cap * 3) // 4)


def _pick_tiles(n_pad, k, feat_esize):
    """Pick row tile tn, K tile tk, padded K, and F buffer count."""
    limit = _vmem_limit_bytes()
    budget = limit - (4 << 20)  # headroom for Mosaic internals / small buffers

    # Row tile: biggest power-of-two multiple of 128 dividing n_pad whose
    # resident f32 rows (acc + target + output, double-buffered) stay modest.
    tn = _LANE
    for cand in (1024, 512, 256, 128):
        if n_pad % cand == 0 and 4 * cand * n_pad * 4 <= budget // 2:
            tn = cand
            break

    def need(tk, n_f_bufs):
        # F slab buffers (feature dtype) + f32 (tn, n_pad) rows (acc/target/out).
        return n_f_bufs * n_pad * tk * feat_esize + 4 * tn * n_pad * 4

    # Prefer a fully VMEM-resident F: single K step -> the F slab is fetched
    # exactly once for ALL row tiles (block index stays (0, 0)).
    k128 = _round_up(k, _LANE)
    if need(k128, 2) <= budget:
        return tn, k128, k128, 2

    # Otherwise: largest 512-aligned K tile that fits with triple buffering,
    # then pad k up to a multiple of tk (zero K-padding is free).
    tk = _LANE
    for m in range(1, 65):
        cand = 512 * m
        if need(cand, 3) <= budget:
            tk = cand
    if tk == _LANE:
        for m in (3, 2, 1):
            cand = 128 * m
            if need(cand, 3) <= budget:
                tk = cand
                break
    k_pad = _round_up(k, tk)
    return tn, tk, k_pad, 3


def _prepare(x, feature_dtype):
    """(b,c,h,w) -> zero-padded (n_pad, k_pad) feature matrix + tiling info."""
    b, c, h, w = x.shape
    n, k = b * c, h * w
    n_pad = _round_up(n, _LANE)
    dt = jnp.bfloat16 if feature_dtype is None else feature_dtype
    esize = jnp.dtype(dt).itemsize
    tn, tk, k_pad, f_bufs = _pick_tiles(n_pad, k, esize)
    f = x.reshape(n, k).astype(dt)
    if (n_pad, k_pad) != (n, k):
        f = jnp.pad(f, ((0, n_pad - n), (0, k_pad - k)))
    return f, n, k, n_pad, k_pad, tn, tk, f_bufs


def _f_block_spec(n_pad, tk, k_tiles, f_bufs):
    """BlockSpec for the (n_pad, tk) F slab; deeper pipelining when K-tiled."""
    idx = lambda i, kk: (0, kk)
    if k_tiles > 1 and f_bufs > 2:
        try:
            return pl.BlockSpec((n_pad, tk), idx, pipeline_mode=pl.Buffered(f_bufs))
        except TypeError:  # older jax without pipeline_mode kwarg
            pass
    return pl.BlockSpec((n_pad, tk), idx)


# ---------------------------------------------------------------------------
# Gram-matrix kernel:  G_rows = (F_rows @ F^T) * scale, accumulated over K.
# Accumulates directly into the VMEM-resident output block (no scratch).
# ---------------------------------------------------------------------------
def _gram_kernel(f_ref, g_ref, *, scale, tn):
    i = pl.program_id(0)
    kk = pl.program_id(1)

    @pl.when(kk == 0)
    def _():
        g_ref[...] = jnp.zeros_like(g_ref)

    row0 = pl.multiple_of(i * tn, tn)
    f_rows = f_ref[pl.ds(row0, tn), :]              # (tn, tk) rows of the slab
    # Contract last dim of both operands -> no in-kernel transpose/relayout.
    g_ref[...] += lax.dot_general(
        f_rows, f_ref[...],
        dimension_numbers=(((1,), (1,)), ((), ())),
        preferred_element_type=jnp.float32)

    @pl.when(kk == pl.num_programs(1) - 1)
    def _():
        g_ref[...] = g_ref[...] * scale


def gram_matrix(x, *, keep_padding=False, feature_dtype=None):
    """x: (b, c, h, w) -> gram matrix, scaled by 1/(b*c*h*w) as in PyTorch."""
    b, c, h, w = x.shape
    f, n, _, n_pad, k_pad, tn, tk, f_bufs = _prepare(x, feature_dtype)
    scale = 1.0 / float(b * c * h * w)
    k_tiles = k_pad // tk

    g = pl.pallas_call(
        functools.partial(_gram_kernel, scale=scale, tn=tn),
        out_shape=jax.ShapeDtypeStruct((n_pad, n_pad), jnp.float32),
        grid_spec=pltpu.PrefetchScalarGridSpec(
            num_scalar_prefetch=0,
            grid=(n_pad // tn, k_tiles),
            in_specs=[_f_block_spec(n_pad, tk, k_tiles, f_bufs)],
            out_specs=pl.BlockSpec((tn, n_pad), lambda i, kk: (i, 0)),
        ),
        compiler_params=pltpu.CompilerParams(
            dimension_semantics=("parallel", "arbitrary"),
            vmem_limit_bytes=_vmem_limit_bytes(),
        ),
    )(f)
    if keep_padding:
        return g
    return g[:n, :n]


# ---------------------------------------------------------------------------
# Fused gram + MSE kernel: accumulate G rows in VMEM scratch and, at the last
# K step, emit the per-row-tile sum of squared differences vs the target gram.
# G never touches HBM; only tiny (8,128) partial blocks are written out.
# ---------------------------------------------------------------------------
def _style_loss_kernel(f_ref, t_ref, part_ref, acc_ref, *, scale, tn):
    i = pl.program_id(0)
    kk = pl.program_id(1)

    @pl.when(kk == 0)
    def _():
        acc_ref[...] = jnp.zeros_like(acc_ref)

    row0 = pl.multiple_of(i * tn, tn)
    f_rows = f_ref[pl.ds(row0, tn), :]              # (tn, tk)
    acc_ref[...] += lax.dot_general(
        f_rows, f_ref[...],
        dimension_numbers=(((1,), (1,)), ((), ())),
        preferred_element_type=jnp.float32)

    @pl.when(kk == pl.num_programs(1) - 1)
    def _():
        diff = acc_ref[...] * scale - t_ref[...]
        # Broadcast the scalar partial into a tiling-friendly (8,128) block.
        part_ref[...] = jnp.sum(diff * diff) + jnp.zeros_like(part_ref)


def style_loss(x, target_gram_padded, target_n, *, feature_dtype=None):
    """mean((gram(x) - target)^2), matching nn.functional.mse_loss semantics."""
    b, c, h, w = x.shape
    if b * c != target_n:
        raise ValueError(
            f"x has b*c={b*c} channels-rows but target gram was built for "
            f"{target_n}; gram shapes must match (as in the PyTorch module).")
    f, n, _, n_pad, k_pad, tn, tk, f_bufs = _prepare(x, feature_dtype)
    assert target_gram_padded.shape == (n_pad, n_pad)
    scale = 1.0 / float(b * c * h * w)
    k_tiles = k_pad // tk
    n_row_tiles = n_pad // tn

    partials = pl.pallas_call(
        functools.partial(_style_loss_kernel, scale=scale, tn=tn),
        out_shape=jax.ShapeDtypeStruct((n_row_tiles * 8, 128), jnp.float32),
        grid_spec=pltpu.PrefetchScalarGridSpec(
            num_scalar_prefetch=0,
            grid=(n_row_tiles, k_tiles),
            in_specs=[
                _f_block_spec(n_pad, tk, k_tiles, f_bufs),
                pl.BlockSpec((tn, n_pad), lambda i, kk: (i, 0)),
            ],
            out_specs=pl.BlockSpec((8, 128), lambda i, kk: (i, 0)),
            scratch_shapes=[pltpu.VMEM((tn, n_pad), jnp.float32)],
        ),
        compiler_params=pltpu.CompilerParams(
            dimension_semantics=("parallel", "arbitrary"),
            vmem_limit_bytes=_vmem_limit_bytes(),
        ),
    )(f, target_gram_padded)

    # Padded gram rows/cols are exactly zero in both G and the target, so they
    # add nothing to the sum; divide by the UNPADDED element count n*n.
    per_tile = partials.reshape(n_row_tiles, 8, 128)[:, 0, 0]
    return jnp.sum(per_tile) * (1.0 / float(n * n))


# ---------------------------------------------------------------------------
# StyleLoss module analogue
# ---------------------------------------------------------------------------
class StyleLoss:
    """feature_dtype=None -> bf16 features with f32 MXU accumulation (fast);
    pass jnp.float32 for full-precision features."""

    def __init__(self, target_feature, *, feature_dtype=None):
        self._feature_dtype = feature_dtype
        b, c, _, _ = target_feature.shape
        self._target_n = b * c
        # Fixed (detached) target gram, computed once with the Pallas kernel.
        self._target_padded = jax.lax.stop_gradient(
            gram_matrix(target_feature, keep_padding=True,
                        feature_dtype=feature_dtype))
        self.target = self._target_padded[:self._target_n, :self._target_n]
        # TODO(synk): self.loss as Python-side mutable state will not compose
        # with jit/grad; kept for parity with the PyTorch module.
        self.loss = None

    def __call__(self, x):
        self.loss = style_loss(x, self._target_padded, self._target_n,
                               feature_dtype=self._feature_dtype)
        return x  # forward is identity on x (pass-through), like the nn.Module


if __name__ == "__main__":
    key = jax.random.PRNGKey(0)
    k1, k2 = jax.random.split(key)

    b, c, h, w = 2, 4, 16, 16  # NCHW
    target_feature = jax.random.normal(k1, (b, c, h, w), dtype=jnp.float32)
    x = jax.random.normal(k2, (b, c, h, w), dtype=jnp.float32)

    def ref_gram(t, dt):
        bb, cc, hh, ww = t.shape
        f = t.reshape(bb * cc, hh * ww).astype(dt)
        g = jnp.dot(f, f.T, precision=jax.lax.Precision.HIGHEST,
                    preferred_element_type=jnp.float32)
        return g / float(bb * cc * hh * ww)

    # --- f32 feature path: tight check of the kernel math -------------------
    mod32 = StyleLoss(target_feature, feature_dtype=jnp.float32)
    y32 = mod32(x)
    jax.block_until_ready(y32)
    jax.block_until_ready(mod32.loss)

    g_t32 = ref_gram(target_feature, jnp.float32)
    g_x32 = ref_gram(x, jnp.float32)
    loss32 = jnp.mean((g_x32 - g_t32) ** 2)

    assert jnp.array_equal(y32, x), "forward must be identity on x"
    assert jnp.allclose(mod32.target, g_t32, rtol=1e-4, atol=1e-5), "target gram mismatch (f32)"
    assert jnp.allclose(mod32.loss, loss32, rtol=1e-3, atol=1e-8), (mod32.loss, loss32)

    # --- default (bf16-feature) path: check vs bf16-consistent reference ----
    mod16 = StyleLoss(target_feature)
    y16 = mod16(x)
    jax.block_until_ready(y16)
    jax.block_until_ready(mod16.loss)

    g_t16 = ref_gram(target_feature, jnp.bfloat16)
    g_x16 = ref_gram(x, jnp.bfloat16)
    loss16 = jnp.mean((g_x16 - g_t16) ** 2)

    assert jnp.array_equal(y16, x), "forward must be identity on x"
    assert jnp.allclose(mod16.target, g_t16, rtol=2e-3, atol=2e-5), "target gram mismatch (bf16)"
    assert jnp.allclose(mod16.loss, loss16, rtol=2e-3, atol=1e-7), (mod16.loss, loss16)
    # bf16 path should still land close to the full-precision loss.
    assert jnp.allclose(mod16.loss, loss32, rtol=0.1, atol=1e-6), (mod16.loss, loss32)

    print("KERNEL_OK")
</pallas_src>

<mosaic_0001>
module attributes {stable_mosaic.version = 11 : i64} {
  func.func @_gram_kernel(%arg0: i32, %arg1: i32, %arg2: memref<128x256xf32, #tpu.memory_space<vmem>>, %arg3: memref<128x128xf32, #tpu.memory_space<vmem>>) attributes {dimension_semantics = [#tpu.dimension_semantics<parallel>, #tpu.dimension_semantics<arbitrary>], iteration_bounds = array<i64: 1, 1>, scalar_prefetch = 0 : i64, scratch_operands = 0 : i64, tpu.core_type = #tpu.core_type<tc>, window_params = [{transform_indices = @transform_0, window_bounds = array<i64: 128, 256>}, {transform_indices = @transform_1, window_bounds = array<i64: 128, 128>}]} {
    %c0_i32 = arith.constant 0 : i32
    %0 = arith.cmpi eq, %arg1, %c0_i32 : i32
    %1 = arith.extui %0 : i1 to i32
    %c0_i32_0 = arith.constant 0 : i32
    %2 = arith.cmpi ne, %1, %c0_i32_0 : i32
    scf.if %2 {
      %cst_9 = arith.constant 0.000000e+00 : f32
      %15 = vector.broadcast %cst_9 : f32 to vector<128x128xf32>
      %c0_10 = arith.constant 0 : index
      %c0_11 = arith.constant 0 : index
      %16 = vector.load %arg3[%c0_10, %c0_11] : memref<128x128xf32, #tpu.memory_space<vmem>>, vector<128x128xf32>
      tpu.vector_store %arg3[%c0_10, %c0_11], %15 {strides = array<i32>} : memref<128x128xf32, #tpu.memory_space<vmem>>, vector<128x128xf32>,
    } else {
    }
    %c128_i32 = arith.constant 128 : i32
    %3 = arith.muli %arg0, %c128_i32 : i32
    %4 = tpu.assume_multiple %3, 128 : i32
    %5 = arith.index_cast %4 : i32 to index
    %c0 = arith.constant 0 : index
    %6 = vector.load %arg2[%5, %c0] : memref<128x256xf32, #tpu.memory_space<vmem>>, vector<128x256xf32>
    %c0_1 = arith.constant 0 : index
    %c0_2 = arith.constant 0 : index
    %7 = vector.load %arg3[%c0_1, %c0_2] : memref<128x128xf32, #tpu.memory_space<vmem>>, vector<128x128xf32>
    %c0_3 = arith.constant 0 : index
    %c0_4 = arith.constant 0 : index
    %8 = vector.load %arg2[%c0_3, %c0_4] : memref<128x256xf32, #tpu.memory_space<vmem>>, vector<128x256xf32>
    %cst = arith.constant dense<0.000000e+00> : vector<128x128xf32>
    %9 = tpu.matmul %6, %8, %cst {dimension_numbers = #tpu.dot_dimension_numbers<[1], [1], [0], [0], [0, 0, 1, 0], [], []>} : vector<128x256xf32>, vector<128x256xf32>, vector<128x128xf32> -> vector<128x128xf32>
    %10 = arith.addf %7, %9 : vector<128x128xf32>
    %c0_5 = arith.constant 0 : index
    %c0_6 = arith.constant 0 : index
    %11 = vector.load %arg3[%c0_5, %c0_6] : memref<128x128xf32, #tpu.memory_space<vmem>>, vector<128x128xf32>
    tpu.vector_store %arg3[%c0_5, %c0_6], %10 {strides = array<i32>} : memref<128x128xf32, #tpu.memory_space<vmem>>, vector<128x128xf32>,
    %c0_i32_7 = arith.constant 0 : i32
    %12 = arith.cmpi eq, %arg1, %c0_i32_7 : i32
    %13 = arith.extui %12 : i1 to i32
    %c0_i32_8 = arith.constant 0 : i32
    %14 = arith.cmpi ne, %13, %c0_i32_8 : i32
    scf.if %14 {
      %c0_9 = arith.constant 0 : index
      %c0_10 = arith.constant 0 : index
      %15 = vector.load %arg3[%c0_9, %c0_10] : memref<128x128xf32, #tpu.memory_space<vmem>>, vector<128x128xf32>
      %cst_11 = arith.constant 4.8828125E-4 : f32
      %16 = vector.broadcast %cst_11 : f32 to vector<128x128xf32>
      %17 = arith.mulf %15, %16 : vector<128x128xf32>
      %c0_12 = arith.constant 0 : index
      %c0_13 = arith.constant 0 : index
      %18 = vector.load %arg3[%c0_12, %c0_13] : memref<128x128xf32, #tpu.memory_space<vmem>>, vector<128x128xf32>
      tpu.vector_store %arg3[%c0_12, %c0_13], %17 {strides = array<i32>} : memref<128x128xf32, #tpu.memory_space<vmem>>, vector<128x128xf32>,
    } else {
    }
    return
  }
  func.func @transform_0(%arg0: i32, %arg1: i32) -> (i32, i32) {
    %c0_i32 = arith.constant 0 : i32
    %c0_i32_0 = arith.constant 0 : i32
    return %c0_i32, %arg1 : i32, i32
  }
  func.func @transform_1(%arg0: i32, %arg1: i32) -> (i32, i32) {
    %c0_i32 = arith.constant 0 : i32
    %c0_i32_0 = arith.constant 0 : i32
    return %arg0, %c0_i32 : i32, i32
  }
}

</mosaic_0001>

<llo_original>
// kernel: tpu_custom_call.1
$region0: #{tpu_custom_call.1}
  #allocation0 [shape = 'u32[]', space=smem, size = 0x4, offset = 0x4, fixed_abs, tag = 'smem constant byte address 0x4 - core index']
  #allocation1 [shape = 'u32[144,128]{1,0:T(1,128)}', space=vmem, size = 0x12000, scoped, tag = 'internal scratch']
  %s0 = inlined_call_operand.hbm [shape: f32[128,256], index: 0, kind: input, shape index: {}]
  %s1 = inlined_call_operand.hbm [shape: f32[128,128], index: 1, kind: output, shape index: {}]
  %s2 = sld [smem:[#allocation0]]
  $region26: #{tpu_custom_call.1} parent=0
    _
  %s4 = ssub.s32 1, %s2
  %s5 = scalar_select 0, %s4, %s2
  $region1: #{tpu_custom_call.1} parent=0
    #allocation2 [shape = 'u8[131072]{0}', space=vmem, size = 0x20000, scoped, tag = 'input window, operand 0, single buffered']
    #allocation3 [shape = 's32[1]{0}', space=sflag, size = 0x4, scoped, tag = 'scoped memory for tpu_custom_call.1']
    #allocation4 [shape = 's32[1]{0}', space=sflag, size = 0x4, scoped, tag = 'scoped memory for tpu_custom_call.1']
    #allocation5 [shape = 'u8[65536]{0}', space=vmem, size = 0x10000, scoped, tag = 'output window, operand 0, single buffered']
    %6 = vsyncpa [#allocation3], 0
    %7 = vsyncpa [#allocation4], 0
    // Predicated region
    $region2: #{tpu_custom_call.1} parent=1 // pred_check
      _
    $region3: #{tpu_custom_call.1} parent=1 // pred_check_branch
      %9 = sbr.rel (0) target = $region5
    $region4: #{tpu_custom_call.1} parent=1 // pred_region
      %s11 = ssub.s32 4096, 4096
      %12 = vsyncadd [#allocation3], %s11
      %s13 = sshll.u32 [#allocation2], 4
      %s14 = int_to_ptr.vmem [resolvable:$true] %s13
      %19 = dma.hbm_to_vmem [thread:$0]  %s0, 4096, %s14, [#allocation3], 256, 256, 16
    $region5: #{tpu_custom_call.1} parent=1 // pred_fallthru
      _
    // Predicated region
    $region6: #{tpu_custom_call.1} parent=1 // pred_check
      _
    $region7: #{tpu_custom_call.1} parent=1 // pred_check_branch
      %21 = sbr.rel (0) target = $region9
    $region8: #{tpu_custom_call.1} parent=1 // pred_region
      %22 = dma.done [#allocation3], 4096
    $region9: #{tpu_custom_call.1} parent=1 // pred_fallthru
      _
    %p23 = scmp.eq.s32.totalorder 0, 0
    // Predicated region
    $region10: #{tpu_custom_call.1} parent=1 // pred_check
      %p24 = pneg %p23
    $region11: #{tpu_custom_call.1} parent=1 // pred_check_branch
      %26 = sbr.rel (%p24) target = $region13
    $region12: #{tpu_custom_call.1} parent=1 // pred_region
      %27 = vst [vmem:[#allocation5] sm:$0xff] 0.0
      %28 = vst [vmem:[#allocation5 + $0x8] sm:$0xff] 0.0
      %29 = vst [vmem:[#allocation5 + $0x10] sm:$0xff] 0.0
      %30 = vst [vmem:[#allocation5 + $0x18] sm:$0xff] 0.0
      %31 = vst [vmem:[#allocation5 + $0x20] sm:$0xff] 0.0
      %32 = vst [vmem:[#allocation5 + $0x28] sm:$0xff] 0.0
      %33 = vst [vmem:[#allocation5 + $0x30] sm:$0xff] 0.0
      %34 = vst [vmem:[#allocation5 + $0x38] sm:$0xff] 0.0
      %35 = vst [vmem:[#allocation5 + $0x40] sm:$0xff] 0.0
      %36 = vst [vmem:[#allocation5 + $0x48] sm:$0xff] 0.0
      %37 = vst [vmem:[#allocation5 + $0x50] sm:$0xff] 0.0
      %38 = vst [vmem:[#allocation5 + $0x58] sm:$0xff] 0.0
      %39 = vst [vmem:[#allocation5 + $0x60] sm:$0xff] 0.0
      %40 = vst [vmem:[#allocation5 + $0x68] sm:$0xff] 0.0
      %41 = vst [vmem:[#allocation5 + $0x70] sm:$0xff] 0.0
      %42 = vst [vmem:[#allocation5 + $0x78] sm:$0xff] 0.0
    $region13: #{tpu_custom_call.1} parent=1 // pred_fallthru
      _
    %s43 = smul.u32 0, 128
    %s44 = sshra.s32 %s43, 3
    %s45 = sand.u32 %s43, 7
    %s46 = smul.u32 %s44, 2
    %s47 = smul.addr %s46, 8
    %s48 = scalar_lea.vmem [#allocation2], %s47
    %v49 = vld [vmem:[%s48] sm:$0xff]
    %v50 = vld [vmem:[%s48 + $0x8] sm:$0xff]
    %v51 = vld [vmem:[%s48 + $0x10] sm:$0xff]
    %v52 = vld [vmem:[%s48 + $0x18] sm:$0xff]
    %v53 = vld [vmem:[%s48 + $0x20] sm:$0xff]
    %v54 = vld [vmem:[%s48 + $0x28] sm:$0xff]
    %v55 = vld [vmem:[%s48 + $0x30] sm:$0xff]
    %v56 = vld [vmem:[%s48 + $0x38] sm:$0xff]
    %v57 = vld [vmem:[%s48 + $0x40] sm:$0xff]
    %v58 = vld [vmem:[%s48 + $0x48] sm:$0xff]
    %v59 = vld [vmem:[%s48 + $0x50] sm:$0xff]
    %v60 = vld [vmem:[%s48 + $0x58] sm:$0xff]
    %v61 = vld [vmem:[%s48 + $0x60] sm:$0xff]
    %v62 = vld [vmem:[%s48 + $0x68] sm:$0xff]
    %v63 = vld [vmem:[%s48 + $0x70] sm:$0xff]
    %v64 = vld [vmem:[%s48 + $0x78] sm:$0xff]
    %v65 = vld [vmem:[%s48 + $0x80] sm:$0xff]
    %v66 = vld [vmem:[%s48 + $0x88] sm:$0xff]
    %v67 = vld [vmem:[%s48 + $0x90] sm:$0xff]
    %v68 = vld [vmem:[%s48 + $0x98] sm:$0xff]
    %v69 = vld [vmem:[%s48 + $0xa0] sm:$0xff]
    %v70 = vld [vmem:[%s48 + $0xa8] sm:$0xff]
    %v71 = vld [vmem:[%s48 + $0xb0] sm:$0xff]
    %v72 = vld [vmem:[%s48 + $0xb8] sm:$0xff]
    %v73 = vld [vmem:[%s48 + $0xc0] sm:$0xff]
    %v74 = vld [vmem:[%s48 + $0xc8] sm:$0xff]
    %v75 = vld [vmem:[%s48 + $0xd0] sm:$0xff]
    %v76 = vld [vmem:[%s48 + $0xd8] sm:$0xff]
    %v77 = vld [vmem:[%s48 + $0xe0] sm:$0xff]
    %v78 = vld [vmem:[%s48 + $0xe8] sm:$0xff]
    %v79 = vld [vmem:[%s48 + $0xf0] sm:$0xff]
    %v80 = vld [vmem:[%s48 + $0xf8] sm:$0xff]
    %v81 = vld [vmem:[#allocation5] sm:$0xff]
    %v82 = vld [vmem:[#allocation5 + $0x8] sm:$0xff]
    %v83 = vld [vmem:[#allocation5 + $0x10] sm:$0xff]
    %v84 = vld [vmem:[#allocation5 + $0x18] sm:$0xff]
    %v85 = vld [vmem:[#allocation5 + $0x20] sm:$0xff]
    %v86 = vld [vmem:[#allocation5 + $0x28] sm:$0xff]
    %v87 = vld [vmem:[#allocation5 + $0x30] sm:$0xff]
    %v88 = vld [vmem:[#allocation5 + $0x38] sm:$0xff]
    %v89 = vld [vmem:[#allocation5 + $0x40] sm:$0xff]
    %v90 = vld [vmem:[#allocation5 + $0x48] sm:$0xff]
    %v91 = vld [vmem:[#allocation5 + $0x50] sm:$0xff]
    %v92 = vld [vmem:[#allocation5 + $0x58] sm:$0xff]
    %v93 = vld [vmem:[#allocation5 + $0x60] sm:$0xff]
    %v94 = vld [vmem:[#allocation5 + $0x68] sm:$0xff]
    %v95 = vld [vmem:[#allocation5 + $0x70] sm:$0xff]
    %v96 = vld [vmem:[#allocation5 + $0x78] sm:$0xff]
    %v97 = vld [vmem:[#allocation2] sm:$0xff]
    %v98 = vld [vmem:[#allocation2 + $0x8] sm:$0xff]
    %v99 = vld [vmem:[#allocation2 + $0x10] sm:$0xff]
    %v100 = vld [vmem:[#allocation2 + $0x18] sm:$0xff]
    %v101 = vld [vmem:[#allocation2 + $0x20] sm:$0xff]
    %v102 = vld [vmem:[#allocation2 + $0x28] sm:$0xff]
    %v103 = vld [vmem:[#allocation2 + $0x30] sm:$0xff]
    %v104 = vld [vmem:[#allocation2 + $0x38] sm:$0xff]
    %v105 = vld [vmem:[#allocation2 + $0x40] sm:$0xff]
    %v106 = vld [vmem:[#allocation2 + $0x48] sm:$0xff]
    %v107 = vld [vmem:[#allocation2 + $0x50] sm:$0xff]
    %v108 = vld [vmem:[#allocation2 + $0x58] sm:$0xff]
    %v109 = vld [vmem:[#allocation2 + $0x60] sm:$0xff]
    %v110 = vld [vmem:[#allocation2 + $0x68] sm:$0xff]
    %v111 = vld [vmem:[#allocation2 + $0x70] sm:$0xff]
    %v112 = vld [vmem:[#allocation2 + $0x78] sm:$0xff]
    %v113 = vld [vmem:[#allocation2 + $0x80] sm:$0xff]
    %v114 = vld [vmem:[#allocation2 + $0x88] sm:$0xff]
    %v115 = vld [vmem:[#allocation2 + $0x90] sm:$0xff]
    %v116 = vld [vmem:[#allocation2 + $0x98] sm:$0xff]
    %v117 = vld [vmem:[#allocation2 + $0xa0] sm:$0xff]
    %v118 = vld [vmem:[#allocation2 + $0xa8] sm:$0xff]
    %v119 = vld [vmem:[#allocation2 + $0xb0] sm:$0xff]
    %v120 = vld [vmem:[#allocation2 + $0xb8] sm:$0xff]
    %v121 = vld [vmem:[#allocation2 + $0xc0] sm:$0xff]
    %v122 = vld [vmem:[#allocation2 + $0xc8] sm:$0xff]
    %v123 = vld [vmem:[#allocation2 + $0xd0] sm:$0xff]
    %v124 = vld [vmem:[#allocation2 + $0xd8] sm:$0xff]
    %v125 = vld [vmem:[#allocation2 + $0xe0] sm:$0xff]
    %v126 = vld [vmem:[#allocation2 + $0xe8] sm:$0xff]
    %v127 = vld [vmem:[#allocation2 + $0xf0] sm:$0xff]
    %v128 = vld [vmem:[#allocation2 + $0xf8] sm:$0xff]
    %129 = vmatprep.subr.mxu0 %v98
    %130 = vmatpush1.xpose.msra.mxu0 %v97
    %131 = vmatprep.subr.mxu0 %v100
    %132 = vmatpush1.xpose.msra.mxu0 %v99
    %133 = vmatprep.subr.mxu0 %v102
    %134 = vmatpush1.xpose.msra.mxu0 %v101
    %135 = vmatprep.subr.mxu0 %v104
    %136 = vmatpush1.xpose.msra.mxu0 %v103
    %137 = vmatprep.subr.mxu0 %v106
    %138 = vmatpush1.xpose.msra.mxu0 %v105
    %139 = vmatprep.subr.mxu0 %v108
    %140 = vmatpush1.xpose.msra.mxu0 %v107
    %141 = vmatprep.subr.mxu0 %v110
    %142 = vmatpush1.xpose.msra.mxu0 %v109
    %143 = vmatprep.subr.mxu0 %v112
    %144 = vmatpush1.xpose.msra.mxu0 %v111
    %145 = vmatprep.subr.mxu0 %v114
    %146 = vmatpush1.xpose.msra.mxu0 %v113
    %147 = vmatprep.subr.mxu0 %v116
    %148 = vmatpush1.xpose.msra.mxu0 %v115
    %149 = vmatprep.subr.mxu0 %v118
    %150 = vmatpush1.xpose.msra.mxu0 %v117
    %151 = vmatprep.subr.mxu0 %v120
    %152 = vmatpush1.xpose.msra.mxu0 %v119
    %153 = vmatprep.subr.mxu0 %v122
    %154 = vmatpush1.xpose.msra.mxu0 %v121
    %155 = vmatprep.subr.mxu0 %v124
    %156 = vmatpush1.xpose.msra.mxu0 %v123
    %157 = vmatprep.subr.mxu0 %v126
    %158 = vmatpush1.xpose.msra.mxu0 %v125
    %159 = vmatprep.subr.mxu0 %v128
    %160 = vmatpush1.xpose.msra.mxu0 %v127
    %161 = vmatprep.subr.mxu0 0.0
    %162 = vmatpush1.xpose.msra.mxu0 0.0
    %163 = vmatprep.subr.mxu0 0.0
    %164 = vmatpush1.xpose.msra.mxu0 0.0
    %165 = vmatprep.subr.mxu0 0.0
    %166 = vmatpush1.xpose.msra.mxu0 0.0
    %167 = vmatprep.subr.mxu0 0.0
    %168 = vmatpush1.xpose.msra.mxu0 0.0
    %169 = vmatprep.subr.mxu0 0.0
    %170 = vmatpush1.xpose.msra.mxu0 0.0
    %171 = vmatprep.subr.mxu0 0.0
    %172 = vmatpush1.xpose.msra.mxu0 0.0
    %173 = vmatprep.subr.mxu0 0.0
    %174 = vmatpush1.xpose.msra.mxu0 0.0
    %175 = vmatprep.subr.mxu0 0.0
    %176 = vmatpush1.xpose.msra.mxu0 0.0
    %177 = vmatprep.subr.mxu0 0.0
    %178 = vmatpush1.xpose.msra.mxu0 0.0
    %179 = vmatprep.subr.mxu0 0.0
    %180 = vmatpush1.xpose.msra.mxu0 0.0
    %181 = vmatprep.subr.mxu0 0.0
    %182 = vmatpush1.xpose.msra.mxu0 0.0
    %183 = vmatprep.subr.mxu0 0.0
    %184 = vmatpush1.xpose.msra.mxu0 0.0
    %185 = vmatprep.subr.mxu0 0.0
    %186 = vmatpush1.xpose.msra.mxu0 0.0
    %187 = vmatprep.subr.mxu0 0.0
    %188 = vmatpush1.xpose.msra.mxu0 0.0
    %189 = vmatprep.subr.mxu0 0.0
    %190 = vmatpush1.xpose.msra.mxu0 0.0
    %191 = vmatprep.subr.mxu0 0.0
    %192 = vmatpush1.xpose.msra.mxu0 0.0
    %193 = vmatprep.mubr.f32.mxu0 %v50
    %194 = vmatmul.mubr.f32.gmra.mrb[0].mxu0 %v49
    %v195 = vpop.f32.mrb[0].mxu0
    %v196 = vadd.f32 0.0, %v195
    %v197 = vpop.f32.mrb[0].mxu0
    %198 = vmatprep.mubr.f32.mxu0 %v52
    %199 = vmatmul.mubr.f32.gmra.mrb[0].mxu0 %v51
    %v200 = vpop.f32.mrb[0].mxu0
    %v201 = vadd.f32 0.0, %v200
    %v202 = vpop.f32.mrb[0].mxu0
    %203 = vmatprep.mubr.f32.mxu0 %v54
    %204 = vmatmul.mubr.f32.gmra.mrb[0].mxu0 %v53
    %v205 = vpop.f32.mrb[0].mxu0
    %v206 = vadd.f32 0.0, %v205
    %v207 = vpop.f32.mrb[0].mxu0
    %208 = vmatprep.mubr.f32.mxu0 %v56
    %209 = vmatmul.mubr.f32.gmra.mrb[0].mxu0 %v55
    %v210 = vpop.f32.mrb[0].mxu0
    %v211 = vadd.f32 0.0, %v210
    %v212 = vpop.f32.mrb[0].mxu0
    %213 = vmatprep.mubr.f32.mxu0 %v58
    %214 = vmatmul.mubr.f32.gmra.mrb[0].mxu0 %v57
    %v215 = vpop.f32.mrb[0].mxu0
    %v216 = vadd.f32 0.0, %v215
    %v217 = vpop.f32.mrb[0].mxu0
    %218 = vmatprep.mubr.f32.mxu0 %v60
    %219 = vmatmul.mubr.f32.gmra.mrb[0].mxu0 %v59
    %v220 = vpop.f32.mrb[0].mxu0
    %v221 = vadd.f32 0.0, %v220
    %v222 = vpop.f32.mrb[0].mxu0
    %223 = vmatprep.mubr.f32.mxu0 %v62
    %224 = vmatmul.mubr.f32.gmra.mrb[0].mxu0 %v61
    %v225 = vpop.f32.mrb[0].mxu0
    %v226 = vadd.f32 0.0, %v225
    %v227 = vpop.f32.mrb[0].mxu0
    %228 = vmatprep.mubr.f32.mxu0 %v64
    %229 = vmatmul.mubr.f32.gmra.mrb[0].mxu0 %v63
    %v230 = vpop.f32.mrb[0].mxu0
    %v231 = vadd.f32 0.0, %v230
    %v232 = vpop.f32.mrb[0].mxu0
    %233 = vmatprep.mubr.f32.mxu0 %v66
    %234 = vmatmul.mubr.f32.gmra.mrb[0].mxu0 %v65
    %v235 = vpop.f32.mrb[0].mxu0
    %v236 = vadd.f32 0.0, %v235
    %v237 = vpop.f32.mrb[0].mxu0
    %238 = vmatprep.mubr.f32.mxu0 %v68
    %239 = vmatmul.mubr.f32.gmra.mrb[0].mxu0 %v67
    %v240 = vpop.f32.mrb[0].mxu0
    %v241 = vadd.f32 0.0, %v240
    %v242 = vpop.f32.mrb[0].mxu0
    %243 = vmatprep.mubr.f32.mxu0 %v70
    %244 = vmatmul.mubr.f32.gmra.mrb[0].mxu0 %v69
    %v245 = vpop.f32.mrb[0].mxu0
    %v246 = vadd.f32 0.0, %v245
    %v247 = vpop.f32.mrb[0].mxu0
    %248 = vmatprep.mubr.f32.mxu0 %v72
    %249 = vmatmul.mubr.f32.gmra.mrb[0].mxu0 %v71
    %v250 = vpop.f32.mrb[0].mxu0
    %v251 = vadd.f32 0.0, %v250
    %v252 = vpop.f32.mrb[0].mxu0
    %253 = vmatprep.mubr.f32.mxu0 %v74
    %254 = vmatmul.mubr.f32.gmra.mrb[0].mxu0 %v73
    %v255 = vpop.f32.mrb[0].mxu0
    %v256 = vadd.f32 0.0, %v255
    %v257 = vpop.f32.mrb[0].mxu0
    %258 = vmatprep.mubr.f32.mxu0 %v76
    %259 = vmatmul.mubr.f32.gmra.mrb[0].mxu0 %v75
    %v260 = vpop.f32.mrb[0].mxu0
    %v261 = vadd.f32 0.0, %v260
    %v262 = vpop.f32.mrb[0].mxu0
    %263 = vmatprep.mubr.f32.mxu0 %v78
    %264 = vmatmul.mubr.f32.gmra.mrb[0].mxu0 %v77
    %v265 = vpop.f32.mrb[0].mxu0
    %v266 = vadd.f32 0.0, %v265
    %v267 = vpop.f32.mrb[0].mxu0
    %268 = vmatprep.mubr.f32.mxu0 %v80
    %269 = vmatmul.mubr.f32.gmra.mrb[0].mxu0 %v79
    %v270 = vpop.f32.mrb[0].mxu0
    %v271 = vadd.f32 0.0, %v270
    %v272 = vpop.f32.mrb[0].mxu0
    %273 = vdwg.mxu0
    %v274 = vadd.f32 %v81, %v196
    %v275 = vadd.f32 %v82, %v201
    %v276 = vadd.f32 %v83, %v206
    %v277 = vadd.f32 %v84, %v211
    %v278 = vadd.f32 %v85, %v216
    %v279 = vadd.f32 %v86, %v221
    %v280 = vadd.f32 %v87, %v226
    %v281 = vadd.f32 %v88, %v231
    %v282 = vadd.f32 %v89, %v236
    %v283 = vadd.f32 %v90, %v241
    %v284 = vadd.f32 %v91, %v246
    %v285 = vadd.f32 %v92, %v251
    %v286 = vadd.f32 %v93, %v256
    %v287 = vadd.f32 %v94, %v261
    %v288 = vadd.f32 %v95, %v266
    %v289 = vadd.f32 %v96, %v271
    %290 = vst [vmem:[#allocation5] sm:$0xff] %v274
    %291 = vst [vmem:[#allocation5 + $0x8] sm:$0xff] %v275
    %292 = vst [vmem:[#allocation5 + $0x10] sm:$0xff] %v276
    %293 = vst [vmem:[#allocation5 + $0x18] sm:$0xff] %v277
    %294 = vst [vmem:[#allocation5 + $0x20] sm:$0xff] %v278
    %295 = vst [vmem:[#allocation5 + $0x28] sm:$0xff] %v279
    %296 = vst [vmem:[#allocation5 + $0x30] sm:$0xff] %v280
    %297 = vst [vmem:[#allocation5 + $0x38] sm:$0xff] %v281
    %298 = vst [vmem:[#allocation5 + $0x40] sm:$0xff] %v282
    %299 = vst [vmem:[#allocation5 + $0x48] sm:$0xff] %v283
    %300 = vst [vmem:[#allocation5 + $0x50] sm:$0xff] %v284
    %301 = vst [vmem:[#allocation5 + $0x58] sm:$0xff] %v285
    %302 = vst [vmem:[#allocation5 + $0x60] sm:$0xff] %v286
    %303 = vst [vmem:[#allocation5 + $0x68] sm:$0xff] %v287
    %304 = vst [vmem:[#allocation5 + $0x70] sm:$0xff] %v288
    %305 = vst [vmem:[#allocation5 + $0x78] sm:$0xff] %v289
    // Predicated region
    $region14: #{tpu_custom_call.1} parent=1 // pred_check
      %p306 = pneg %p23
    $region15: #{tpu_custom_call.1} parent=1 // pred_check_branch
      %308 = sbr.rel (%p306) target = $region17
    $region16: #{tpu_custom_call.1} parent=1 // pred_region
      %v309 = vld [vmem:[#allocation5] sm:$0xff]
      %v310 = vld [vmem:[#allocation5 + $0x8] sm:$0xff]
      %v311 = vld [vmem:[#allocation5 + $0x10] sm:$0xff]
      %v312 = vld [vmem:[#allocation5 + $0x18] sm:$0xff]
      %v313 = vld [vmem:[#allocation5 + $0x20] sm:$0xff]
      %v314 = vld [vmem:[#allocation5 + $0x28] sm:$0xff]
      %v315 = vld [vmem:[#allocation5 + $0x30] sm:$0xff]
      %v316 = vld [vmem:[#allocation5 + $0x38] sm:$0xff]
      %v317 = vld [vmem:[#allocation5 + $0x40] sm:$0xff]
      %v318 = vld [vmem:[#allocation5 + $0x48] sm:$0xff]
      %v319 = vld [vmem:[#allocation5 + $0x50] sm:$0xff]
      %v320 = vld [vmem:[#allocation5 + $0x58] sm:$0xff]
      %v321 = vld [vmem:[#allocation5 + $0x60] sm:$0xff]
      %v322 = vld [vmem:[#allocation5 + $0x68] sm:$0xff]
      %v323 = vld [vmem:[#allocation5 + $0x70] sm:$0xff]
      %v324 = vld [vmem:[#allocation5 + $0x78] sm:$0xff]
      %v325 = vmul.f32 %v309, 0.00048828125
      %v326 = vmul.f32 %v310, 0.00048828125
      %v327 = vmul.f32 %v311, 0.00048828125
      %v328 = vmul.f32 %v312, 0.00048828125
      %v329 = vmul.f32 %v313, 0.00048828125
      %v330 = vmul.f32 %v314, 0.00048828125
      %v331 = vmul.f32 %v315, 0.00048828125
      %v332 = vmul.f32 %v316, 0.00048828125
      %v333 = vmul.f32 %v317, 0.00048828125
      %v334 = vmul.f32 %v318, 0.00048828125
      %v335 = vmul.f32 %v319, 0.00048828125
      %v336 = vmul.f32 %v320, 0.00048828125
      %v337 = vmul.f32 %v321, 0.00048828125
      %v338 = vmul.f32 %v322, 0.00048828125
      %v339 = vmul.f32 %v323, 0.00048828125
      %v340 = vmul.f32 %v324, 0.00048828125
      %341 = vst [vmem:[#allocation5] sm:$0xff] %v325
      %342 = vst [vmem:[#allocation5 + $0x8] sm:$0xff] %v326
      %343 = vst [vmem:[#allocation5 + $0x10] sm:$0xff] %v327
      %344 = vst [vmem:[#allocation5 + $0x18] sm:$0xff] %v328
      %345 = vst [vmem:[#allocation5 + $0x20] sm:$0xff] %v329
      %346 = vst [vmem:[#allocation5 + $0x28] sm:$0xff] %v330
      %347 = vst [vmem:[#allocation5 + $0x30] sm:$0xff] %v331
      %348 = vst [vmem:[#allocation5 + $0x38] sm:$0xff] %v332
      %349 = vst [vmem:[#allocation5 + $0x40] sm:$0xff] %v333
      %350 = vst [vmem:[#allocation5 + $0x48] sm:$0xff] %v334
      %351 = vst [vmem:[#allocation5 + $0x50] sm:$0xff] %v335
      %352 = vst [vmem:[#allocation5 + $0x58] sm:$0xff] %v336
      %353 = vst [vmem:[#allocation5 + $0x60] sm:$0xff] %v337
      %354 = vst [vmem:[#allocation5 + $0x68] sm:$0xff] %v338
      %355 = vst [vmem:[#allocation5 + $0x70] sm:$0xff] %v339
      %356 = vst [vmem:[#allocation5 + $0x78] sm:$0xff] %v340
    $region17: #{tpu_custom_call.1} parent=1 // pred_fallthru
      _
    // Predicated region
    $region18: #{tpu_custom_call.1} parent=1 // pred_check
      _
    $region19: #{tpu_custom_call.1} parent=1 // pred_check_branch
      %358 = sbr.rel (0) target = $region21
    $region20: #{tpu_custom_call.1} parent=1 // pred_region
      %s360 = ssub.s32 2048, 2048
      %361 = vsyncadd [#allocation4], %s360
      %s362 = sshll.u32 [#allocation5], 4
      %s363 = int_to_ptr.vmem [resolvable:$true] %s362
      %368 = dma.vmem_to_hbm [thread:$0]  %s363, 2048, %s1, [#allocation4], 128, 128, 8
    $region21: #{tpu_custom_call.1} parent=1 // pred_fallthru
      _
    // Predicated region
    $region22: #{tpu_custom_call.1} parent=1 // pred_check
      _
    $region23: #{tpu_custom_call.1} parent=1 // pred_check_branch
      %370 = sbr.rel (0) target = $region25
    $region24: #{tpu_custom_call.1} parent=1 // pred_region
      %371 = dma.done [#allocation4], 2048
    $region25: #{tpu_custom_call.1} parent=1 // pred_fallthru
      _
    %372 = vsyncpa [#allocation3], 1
    %373 = vsyncpa [#allocation4], 1

</llo_original>
